<compile_context>
chip_gen: v7x
topology: tpu7x:2x2x1
jax: 0.10.0
libtpu: 0.0.40
codegen_flags: <defaults>
</compile_context>

<pallas_src>
import functools

import jax
import jax.numpy as jnp
from jax.experimental import pallas as pl
from jax.experimental.pallas import tpu as pltpu

_LANE = 128
_TARGET_BLOCK_BYTES = 4 * 1024 * 1024       # ~4 MiB of HBM I/O per grid step
_VMEM_LIMIT_BYTES = 48 * 1024 * 1024        # 2x(in+out) double buffers <= ~16 MiB


def _elem_right_shift_kernel(scales_ref, x_ref, o_ref, *, shift_bit, lower, upper):
    """Elementwise int-infer rescale + clamp + shift-divide on one VMEM tile."""
    s1 = scales_ref[0]                    # previous layer's scale (SMEM scalar)
    s2 = scales_ref[1]                    # this layer's scale_x   (SMEM scalar)
    # f32 compute is exact for quantized magnitudes <= 2^24 (8/16-bit int data).
    xf = x_ref[...].astype(jnp.float32)

    @pl.when(s1 != s2)
    def _():
        # Bit-faithful to torch: round((x*s1)/s2) -> clamp -> round(/shift_bit).
        # Per-element divides are free here (kernel is HBM-bandwidth bound).
        y = jnp.clip(jnp.round((xf * s1) / s2), lower, upper)
        o_ref[...] = jnp.round(y / shift_bit).astype(o_ref.dtype)

    @pl.when(s1 == s2)
    def _():
        # equal-scale passthrough: torch applies no clamp here either.
        o_ref[...] = jnp.round(xf / shift_bit).astype(o_ref.dtype)


def _pick_tile_rows(rows, target_rows, sublane):
    """Largest legal tile_rows <= target_rows, preferring exact divisors of rows."""
    if rows <= target_rows:
        return rows                        # single full block (full-dim: always legal)
    # Prefer a divisor of rows that keeps the dtype-packed sublane multiple.
    d = (target_rows // sublane) * sublane
    while d >= sublane:
        if rows % d == 0:
            return d
        d -= sublane
    # Next best: any divisor that keeps the 8-row layout rule.
    d = (target_rows // 8) * 8
    while d >= 8:
        if rows % d == 0:
            return d
        d -= 8
    # Fall back: accept one masked partial edge block (still correct).
    return max(sublane, (target_rows // sublane) * sublane)


def elem_right_shift_infer(x, scale_last_layer, scale_x, shift_bit, lower, upper):
    """Run the Pallas kernel on an arbitrarily-shaped tensor (elementwise)."""
    orig_shape = x.shape
    dtype = x.dtype
    flat = x.reshape(-1)                   # free (contiguous), native dtype
    n = flat.shape[0]

    s1 = jnp.asarray(scale_last_layer, jnp.float32)
    s2 = jnp.asarray(scale_x, jnp.float32)
    sb = float(shift_bit)
    lowf = float(lower)
    upf = float(upper)

    n_main = (n // _LANE) * _LANE          # largest lane-aligned prefix

    def _plain_jax(v):                     # tiny (<128 elem) tail path
        vf = v.astype(jnp.float32)
        y = jnp.clip(jnp.round((vf * s1) / s2), lowf, upf)
        y = jnp.where(s1 != s2, y, vf)
        return jnp.round(y / sb).astype(dtype)

    pieces = []
    if n_main > 0:
        main = flat[:n_main]               # identity slice on the common aligned path

        # Wide, lane-dense last dim (n_main is a multiple of 128 by construction).
        width = _LANE
        for w in (1024, 512, 256, _LANE):
            if n_main % w == 0:
                width = w
                break
        rows = n_main // width
        x2d = main.reshape(rows, width)    # free reshape

        itemsize = jnp.dtype(dtype).itemsize
        sublane = {4: 8, 2: 16, 1: 32}.get(itemsize, 8)
        target_rows = max(sublane, _TARGET_BLOCK_BYTES // (width * itemsize))
        tile_rows = _pick_tile_rows(rows, target_rows, sublane)
        grid = (pl.cdiv(rows, tile_rows),)

        scales = jnp.stack([s1, s2]).astype(jnp.float32)   # single (2,) SMEM prefetch

        kernel = functools.partial(
            _elem_right_shift_kernel, shift_bit=sb, lower=lowf, upper=upf)

        out2d = pl.pallas_call(
            kernel,
            out_shape=jax.ShapeDtypeStruct((rows, width), dtype),
            grid_spec=pltpu.PrefetchScalarGridSpec(
                num_scalar_prefetch=1,                 # scales land in SMEM
                grid=grid,
                in_specs=[pl.BlockSpec((tile_rows, width), lambda i, sc: (i, 0))],
                out_specs=pl.BlockSpec((tile_rows, width), lambda i, sc: (i, 0)),
            ),
            compiler_params=pltpu.CompilerParams(
                dimension_semantics=("parallel",),     # lets v7x split across its 2 TCs
                vmem_limit_bytes=_VMEM_LIMIT_BYTES),
        )(scales, x2d)
        pieces.append(out2d.reshape(-1))

    if n_main < n:                         # rare ragged tail, plain JAX
        pieces.append(_plain_jax(flat[n_main:]))

    out_flat = pieces[0] if len(pieces) == 1 else jnp.concatenate(pieces)
    return out_flat.reshape(orig_shape)


class OIntInferElemRightShiftJAX:
    """JAX mirror of OIntInferElemLeftShift (ops_name 'ElemRightShift')."""

    def __init__(self, shift_bit, scale_x, bit_lower_bound, bit_upper_bound,
                 input_shape, output_shape):
        self.ops_name = 'ElemRightShift'
        self.int_infer_flag = False
        self.shift_bit = shift_bit
        self.scale_x = scale_x                      # quantizer_x.scaler
        self.scale_last_layer = None
        self.x_bit_lower_bound = bit_lower_bound
        self.x_bit_upper_bound = bit_upper_bound
        self.input_shape = tuple(input_shape)
        self.output_shape = tuple(output_shape)

    def __call__(self, x, const_n=None):
        if self.int_infer_flag:
            return self._forward_infer(x)
        return self._forward_scale(x)

    def _forward_infer(self, x_int):
        return elem_right_shift_infer(
            x_int, self.scale_last_layer, self.scale_x,
            self.shift_bit, self.x_bit_lower_bound, self.x_bit_upper_bound)

    def _forward_scale(self, scale_x):
        assert tuple(scale_x.shape) == self.input_shape
        # torch.unique(scale_x): calibration tensors carry a single scale value.
        # TODO(synk): jnp.unique(size=1) silently takes one value even if the
        # calibration tensor is not constant (torch.unique would return many).
        self.scale_last_layer = jnp.unique(scale_x, size=1)[0]
        self.int_infer_flag = True
        return jnp.ones(self.output_shape, dtype=scale_x.dtype) * self.scale_x


if __name__ == "__main__":
    key = jax.random.PRNGKey(0)
    B, C, H, W = 2, 4, 16, 16                 # NCHW, like the PyTorch module
    input_shape = (B, C, H, W)
    output_shape = (B, C, H, W)

    # Deterministic synthetic quantizer parameters (module __init__ attributes).
    scale_x = 0.05            # quantizer_x.scaler
    shift_bit = 2.0
    lower, upper = -128.0, 127.0

    mod = OIntInferElemRightShiftJAX(
        shift_bit=shift_bit, scale_x=scale_x,
        bit_lower_bound=lower, bit_upper_bound=upper,
        input_shape=input_shape, output_shape=output_shape)

    # Pass 1: scale-propagation pass (previous layer's constant scale tensor).
    prev_scale = 0.1
    scale_in = jnp.full(input_shape, prev_scale, dtype=jnp.float32)
    scale_out = mod(scale_in, const_n=None)
    jax.block_until_ready(scale_out)
    assert scale_out.shape == output_shape

    # Pass 2: integer-inference pass through the Pallas kernel.
    x_int = jnp.round(jax.random.uniform(key, input_shape, jnp.float32,
                                         minval=-128.0, maxval=127.0))
    y = mod(x_int, const_n=None)
    jax.block_until_ready(y)

    # Pure-JAX reference of the exact torch semantics.
    ref = jnp.round(
        jnp.clip(jnp.round(x_int * prev_scale / scale_x), lower, upper) / shift_bit)
    assert y.shape == input_shape
    assert y.dtype == x_int.dtype
    assert jnp.allclose(y, ref), "mismatch vs reference"

    print("KERNEL_OK")
</pallas_src>

<mosaic_0001>
module attributes {stable_mosaic.version = 11 : i64} {
  func.func @_elem_right_shift_kernel(%arg0: i32, %arg1: memref<2xf32, #tpu.memory_space<smem>>, %arg2: memref<2x1024xf32, #tpu.memory_space<vmem>>, %arg3: memref<2x1024xf32, #tpu.memory_space<vmem>>) attributes {dimension_semantics = [#tpu.dimension_semantics<parallel>], iteration_bounds = array<i64: 1>, scalar_prefetch = 1 : i64, scratch_operands = 0 : i64, tpu.core_type = #tpu.core_type<tc>, window_params = [{transform_indices = @transform_0, window_bounds = array<i64: 2, 1024>}, {transform_indices = @transform_1, window_bounds = array<i64: 2, 1024>}]} {
    %c0 = arith.constant 0 : index
    %0 = memref.load %arg1[%c0] : memref<2xf32, #tpu.memory_space<smem>>
    %c1 = arith.constant 1 : index
    %1 = memref.load %arg1[%c1] : memref<2xf32, #tpu.memory_space<smem>>
    %c0_0 = arith.constant 0 : index
    %c0_1 = arith.constant 0 : index
    %2 = vector.load %arg2[%c0_0, %c0_1] : memref<2x1024xf32, #tpu.memory_space<vmem>>, vector<2x1024xf32>
    %3 = arith.cmpf one, %0, %1 : f32
    %4 = arith.extui %3 : i1 to i32
    %c0_i32 = arith.constant 0 : i32
    %5 = arith.cmpi ne, %4, %c0_i32 : i32
    scf.if %5 {
      %9 = vector.broadcast %0 : f32 to vector<2x1024xf32>
      %10 = arith.mulf %2, %9 : vector<2x1024xf32>
      %11 = vector.broadcast %1 : f32 to vector<2x1024xf32>
      %12 = arith.divf %10, %11 : vector<2x1024xf32>
      %13 = math.roundeven %12 : vector<2x1024xf32>
      %cst = arith.constant -1.280000e+02 : f32
      %cst_3 = arith.constant 1.270000e+02 : f32
      %14 = vector.broadcast %cst : f32 to vector<2x1024xf32>
      %15 = arith.maximumf %14, %13 : vector<2x1024xf32>
      %16 = vector.broadcast %cst_3 : f32 to vector<2x1024xf32>
      %17 = arith.minimumf %16, %15 : vector<2x1024xf32>
      %cst_4 = arith.constant 2.000000e+00 : f32
      %18 = vector.broadcast %cst_4 : f32 to vector<2x1024xf32>
      %19 = arith.divf %17, %18 : vector<2x1024xf32>
      %20 = math.roundeven %19 : vector<2x1024xf32>
      %c0_5 = arith.constant 0 : index
      %c0_6 = arith.constant 0 : index
      %21 = vector.load %arg3[%c0_5, %c0_6] : memref<2x1024xf32, #tpu.memory_space<vmem>>, vector<2x1024xf32>
      tpu.vector_store %arg3[%c0_5, %c0_6], %20 {strides = array<i32>} : memref<2x1024xf32, #tpu.memory_space<vmem>>, vector<2x1024xf32>,
    } else {
    }
    %6 = arith.cmpf oeq, %0, %1 : f32
    %7 = arith.extui %6 : i1 to i32
    %c0_i32_2 = arith.constant 0 : i32
    %8 = arith.cmpi ne, %7, %c0_i32_2 : i32
    scf.if %8 {
      %cst = arith.constant 2.000000e+00 : f32
      %9 = vector.broadcast %cst : f32 to vector<2x1024xf32>
      %10 = arith.divf %2, %9 : vector<2x1024xf32>
      %11 = math.roundeven %10 : vector<2x1024xf32>
      %c0_3 = arith.constant 0 : index
      %c0_4 = arith.constant 0 : index
      %12 = vector.load %arg3[%c0_3, %c0_4] : memref<2x1024xf32, #tpu.memory_space<vmem>>, vector<2x1024xf32>
      tpu.vector_store %arg3[%c0_3, %c0_4], %11 {strides = array<i32>} : memref<2x1024xf32, #tpu.memory_space<vmem>>, vector<2x1024xf32>,
    } else {
    }
    return
  }
  func.func @transform_0(%arg0: i32, %arg1: memref<2xf32, #tpu.memory_space<smem>>) -> (i32, i32) {
    %c0_i32 = arith.constant 0 : i32
    %c0_i32_0 = arith.constant 0 : i32
    return %arg0, %c0_i32 : i32, i32
  }
  func.func @transform_1(%arg0: i32, %arg1: memref<2xf32, #tpu.memory_space<smem>>) -> (i32, i32) {
    %c0_i32 = arith.constant 0 : i32
    %c0_i32_0 = arith.constant 0 : i32
    return %arg0, %c0_i32 : i32, i32
  }
}

</mosaic_0001>

<llo_original>
// kernel: tpu_custom_call.1
$region0: #{tpu_custom_call.1}
  #allocation0 [shape = 'u32[]', space=smem, size = 0x4, offset = 0x4, fixed_abs, tag = 'smem constant byte address 0x4 - core index']
  #allocation1 [shape = 'u32[144,128]{1,0:T(1,128)}', space=vmem, size = 0x12000, scoped, tag = 'internal scratch']
  #allocation2 [shape = 's32[1]{0}', space=sflag, size = 0x4, scoped, tag = 'scoped memory for tpu_custom_call.1']
  #allocation3 [shape = 'u8[512]{0}', space=smem, size = 0x200, scoped, tag = 'prefetched SMEM operand 0']
  %s0 = inlined_call_operand.hbm [shape: f32[2], index: 0, kind: input, shape index: {}]
  %s1 = inlined_call_operand.hbm [shape: f32[2,1024], index: 1, kind: input, shape index: {}]
  %s2 = inlined_call_operand.hbm [shape: f32[2,1024], index: 2, kind: output, shape index: {}]
  %s3 = sld [smem:[#allocation0]]
  $region26: #{tpu_custom_call.1} parent=0
    _
  %s5 = ssub.s32 1, %s3
  %s6 = scalar_select 0, %s5, %s3
  %8 = dma.hbm_to_smem %s0, 16, [#allocation3], [#allocation2]
  %9 = dma.done [#allocation2], 16
  %10 = sfence
  $region1: #{tpu_custom_call.1} parent=0
    #allocation4 [shape = 'u8[8192]{0}', space=vmem, size = 0x2000, scoped, tag = 'input window, operand 1, single buffered']
    #allocation5 [shape = 's32[1]{0}', space=sflag, size = 0x4, scoped, tag = 'scoped memory for tpu_custom_call.1']
    #allocation6 [shape = 's32[1]{0}', space=sflag, size = 0x4, scoped, tag = 'scoped memory for tpu_custom_call.1']
    #allocation7 [shape = 'u8[8192]{0}', space=vmem, size = 0x2000, scoped, tag = 'output window, operand 0, single buffered']
    %11 = vsyncpa [#allocation5], 0
    %12 = vsyncpa [#allocation6], 0
    // Predicated region
    $region2: #{tpu_custom_call.1} parent=1 // pred_check
      _
    $region3: #{tpu_custom_call.1} parent=1 // pred_check_branch
      %14 = sbr.rel (0) target = $region5
    $region4: #{tpu_custom_call.1} parent=1 // pred_region
      %s16 = ssub.s32 256, 256
      %17 = vsyncadd [#allocation5], %s16
      %s19 = sshll.u32 [#allocation4], 4
      %s20 = int_to_ptr.vmem [resolvable:$true] %s19
      %22 = dma.hbm_to_vmem [thread:$0]  %s1, 256, %s20, [#allocation5]
    $region5: #{tpu_custom_call.1} parent=1 // pred_fallthru
      _
    // Predicated region
    $region6: #{tpu_custom_call.1} parent=1 // pred_check
      _
    $region7: #{tpu_custom_call.1} parent=1 // pred_check_branch
      %24 = sbr.rel (0) target = $region9
    $region8: #{tpu_custom_call.1} parent=1 // pred_region
      %25 = dma.done [#allocation5], 256
    $region9: #{tpu_custom_call.1} parent=1 // pred_fallthru
      _
    %s26 = sld [smem:[#allocation3]]
    %s27 = sld [smem:[#allocation3 + $0x1]]
    %v28 = vld [vmem:[#allocation4] sm:$0xff]
    %v29 = vld [vmem:[#allocation4 + $0x8] sm:$0xff]
    %p30 = scmp.ne.f32.partialorder %s26, %s27
    // Predicated region
    $region10: #{tpu_custom_call.1} parent=1 // pred_check
      %p31 = pneg %p30
    $region11: #{tpu_custom_call.1} parent=1 // pred_check_branch
      %33 = sbr.rel (%p31) target = $region13
    $region12: #{tpu_custom_call.1} parent=1 // pred_region
      %v34 = vstv %s26
      %v35 = vmul.f32 %v28, %v34
      %v36 = vmul.f32 %v29, %v34
      %v37 = vstv %s27
      %v38 = vrcp.pop %v37
      %v39 = vmul.f32 %v35, %v38
      %v40 = vmul.f32 %v36, %v38
      %v41 = vround.ne.pseudo %v39
      %v42 = vround.ne.pseudo %v40
      %v43 = vmax.f32 %v41, -128.0
      %v44 = vmax.f32 %v42, -128.0
      %v45 = vmin.f32 %v43, 127.0
      %v46 = vmin.f32 %v44, 127.0
      %v47 = vrcp.pop 2.0
      %v48 = vmul.f32 %v45, %v47
      %v49 = vmul.f32 %v46, %v47
      %v50 = vround.ne.pseudo %v48
      %v51 = vround.ne.pseudo %v49
      %52 = vst [vmem:[#allocation7] sm:$0xff] %v50
      %53 = vst [vmem:[#allocation7 + $0x8] sm:$0xff] %v51
    $region13: #{tpu_custom_call.1} parent=1 // pred_fallthru
      _
    %p54 = scmp.eq.f32.partialorder %s26, %s27
    // Predicated region
    $region14: #{tpu_custom_call.1} parent=1 // pred_check
      %p55 = pneg %p54
    $region15: #{tpu_custom_call.1} parent=1 // pred_check_branch
      %57 = sbr.rel (%p55) target = $region17
    $region16: #{tpu_custom_call.1} parent=1 // pred_region
      %v58 = vrcp.pop 2.0
      %v59 = vmul.f32 %v28, %v58
      %v60 = vmul.f32 %v29, %v58
      %v61 = vround.ne.pseudo %v59
      %v62 = vround.ne.pseudo %v60
      %63 = vst [vmem:[#allocation7] sm:$0xff] %v61
      %64 = vst [vmem:[#allocation7 + $0x8] sm:$0xff] %v62
    $region17: #{tpu_custom_call.1} parent=1 // pred_fallthru
      _
    // Predicated region
    $region18: #{tpu_custom_call.1} parent=1 // pred_check
      _
    $region19: #{tpu_custom_call.1} parent=1 // pred_check_branch
      %66 = sbr.rel (0) target = $region21
    $region20: #{tpu_custom_call.1} parent=1 // pred_region
      %s68 = ssub.s32 256, 256
      %69 = vsyncadd [#allocation6], %s68
      %s71 = sshll.u32 [#allocation7], 4
      %s72 = int_to_ptr.vmem [resolvable:$true] %s71
      %74 = dma.vmem_to_hbm [thread:$0]  %s72, 256, %s2, [#allocation6]
    $region21: #{tpu_custom_call.1} parent=1 // pred_fallthru
      _
    // Predicated region
    $region22: #{tpu_custom_call.1} parent=1 // pred_check
      _
    $region23: #{tpu_custom_call.1} parent=1 // pred_check_branch
      %76 = sbr.rel (0) target = $region25
    $region24: #{tpu_custom_call.1} parent=1 // pred_region
      %77 = dma.done [#allocation6], 256
    $region25: #{tpu_custom_call.1} parent=1 // pred_fallthru
      _
    %78 = vsyncpa [#allocation5], 1
    %79 = vsyncpa [#allocation6], 1

</llo_original>
